<compile_context>
chip_gen: v7x
topology: tpu7x:2x2x1
jax: 0.10.0
libtpu: 0.0.40
codegen_flags: <defaults>
</compile_context>

<pallas_src>
import jax
import jax.numpy as jnp
from jax.experimental import pallas as pl
from jax.experimental.pallas import tpu as pltpu


def mlp_kernel(x_ref, w1_ref, b1_ref, w2_ref, b2_ref, w3_ref, b3_ref, o_ref):
    # x tile (tm, in_dim) arrives f32; cast to the matmul dtype in-kernel
    # (saves the wrapper-side cast pass over HBM).
    x = x_ref[...].astype(w1_ref.dtype)

    # Layer 1: h1^T = W1 @ x^T, expressed as a dot_general contracting the
    # `in_dim` axes of both operands (the q @ k.T pattern) -> (h1_dim, tm).
    # Batch lands on the MXU N / lane axis; the streamed operand is the tiny
    # weight matrix, not TILE_M rows.
    h = jax.lax.dot_general(
        w1_ref[...], x,
        dimension_numbers=(((1,), (1,)), ((), ())),
        preferred_element_type=jnp.float32)
    h = jnp.maximum(h + b1_ref[...], 0.0)                 # (64, tm), f32 VPU

    # Layer 2: (16, 64) @ (64, tm) -> (16, tm).
    h = jnp.dot(w2_ref[...], h.astype(w2_ref.dtype),
                preferred_element_type=jnp.float32)
    h = jnp.maximum(h + b2_ref[...], 0.0)                 # (16, tm)

    # Layer 3: (8, 16) @ (16, tm) -> (8, tm); no activation.
    h = jnp.dot(w3_ref[...], h.astype(w3_ref.dtype),
                preferred_element_type=jnp.float32)
    # Lane-dense (out_dim, tm) store; the partial tail block's out-of-range
    # columns are masked by Pallas (never written to HBM).
    o_ref[...] = h + b3_ref[...]


TILE_M_DEFAULT = 8192  # rows per grid step; ~8 MiB/step VMEM, fits v5e/v6e/v7x


def simple_nn_forward(x, params, *, tile_m=TILE_M_DEFAULT, use_bf16=True):
    # params use PyTorch nn.Linear layout: W (out_features, in_features), b (out,)
    w1, b1, w2, b2, w3, b3 = params
    batch, in_dim = x.shape
    h1_dim = w1.shape[0]
    h2_dim = w2.shape[0]
    out_dim = w3.shape[0]

    compute_dtype = jnp.bfloat16 if use_bf16 else jnp.float32
    # Weights/biases total ~13 KiB: casting/reshaping them here is free.
    # Activations are deliberately NOT touched in the wrapper.
    w1c, w2c, w3c = (w.astype(compute_dtype) for w in (w1, w2, w3))
    b1c, b2c, b3c = (b.reshape(-1, 1).astype(jnp.float32) for b in (b1, b2, b3))

    # Batch tile: multiple of 128 (lane dim of the transposed output), capped
    # at ceil(batch/2) so the "parallel" grid has >= 2 steps (both v7x TCs
    # busy).  Small batches use a single full-array block.
    tile_m = max(128, (int(tile_m) // 128) * 128)
    if batch <= 128:
        tm = batch
    else:
        half = pl.cdiv(batch, 2)
        tm = max(128, min(tile_m, pl.cdiv(half, 128) * 128))
    grid = (pl.cdiv(batch, tm),)

    flops = 2 * batch * (in_dim * h1_dim + h1_dim * h2_dim + h2_dim * out_dim)
    bytes_accessed = (
        x.size * x.dtype.itemsize
        + sum(a.size * a.dtype.itemsize for a in (w1c, b1c, w2c, b2c, w3c, b3c))
        + batch * out_dim * 4)

    def const_spec(shape):
        # Same block every grid step -> stays VMEM-resident (single DMA).
        return pl.BlockSpec(shape, lambda i: (0, 0))

    out_t = pl.pallas_call(
        mlp_kernel,
        out_shape=jax.ShapeDtypeStruct((out_dim, batch), jnp.float32),
        grid=grid,
        in_specs=[
            pl.BlockSpec((tm, in_dim), lambda i: (i, 0)),   # x: tiled over batch
            const_spec((h1_dim, in_dim)),                   # W1 (out, in)
            const_spec((h1_dim, 1)),                        # b1
            const_spec((h2_dim, h1_dim)),                   # W2
            const_spec((h2_dim, 1)),                        # b2
            const_spec((out_dim, h2_dim)),                  # W3
            const_spec((out_dim, 1)),                       # b3
        ],
        out_specs=pl.BlockSpec((out_dim, tm), lambda i: (0, i)),
        compiler_params=pltpu.CompilerParams(
            dimension_semantics=("parallel",),  # batch steps independent
        ),
        cost_estimate=pl.CostEstimate(
            flops=flops, transcendentals=0, bytes_accessed=bytes_accessed),
    )(x, w1c, b1c, w2c, b2c, w3c, b3c)

    # Kernel emits the lane-dense (out_dim, batch) layout; transposing this
    # tiny tensor back to PyTorch's (batch, out_dim) costs ~batch*out_dim*8 B,
    # negligible vs. the x read.
    return out_t.T


def init_params(key, input_dim, output_dim):
    # Deterministic init mimicking nn.Linear's U(-1/sqrt(fan_in), 1/sqrt(fan_in)),
    # stored in PyTorch layout: W (out, in), b (out,).
    dims = [(input_dim, 64), (64, 16), (16, output_dim)]
    params = []
    for i, (fan_in, fan_out) in enumerate(dims):
        kw, kb = jax.random.split(jax.random.fold_in(key, i))
        bound = 1.0 / jnp.sqrt(jnp.float32(fan_in))
        w = jax.random.uniform(kw, (fan_out, fan_in), jnp.float32, -bound, bound)
        b = jax.random.uniform(kb, (fan_out,), jnp.float32, -bound, bound)
        params.extend([w, b])
    return tuple(params)


def reference_forward(x, params):
    w1, b1, w2, b2, w3, b3 = params
    h1 = jnp.maximum(x @ w1.T + b1, 0.0)
    h2 = jnp.maximum(h1 @ w2.T + b2, 0.0)
    return h2 @ w3.T + b3


if __name__ == "__main__":
    key = jax.random.PRNGKey(0)
    batch, input_dim, output_dim = 200, 32, 8

    kx, kp = jax.random.split(key)
    x = jax.random.normal(kx, (batch, input_dim), jnp.float32)
    params = init_params(kp, input_dim, output_dim)

    # batch=200 -> tm=128 -> grid=(2,): exercises the multi-step "parallel"
    # path plus the masked partial tail block (rows 128..199 valid, rest
    # discarded by Pallas on write).
    out = jax.block_until_ready(simple_nn_forward(x, params, use_bf16=True))
    ref = reference_forward(x, params)
    assert out.shape == (batch, output_dim)
    # bf16 matmul operands -> relaxed tolerance vs. the f32 reference.
    assert jnp.allclose(out, ref, atol=5e-2, rtol=5e-2), float(
        jnp.max(jnp.abs(out - ref)))

    # Pure-f32 path must match the reference closely.
    out_f32 = jax.block_until_ready(simple_nn_forward(x, params, use_bf16=False))
    assert jnp.allclose(out_f32, ref, atol=1e-4, rtol=1e-4), float(
        jnp.max(jnp.abs(out_f32 - ref)))

    print("KERNEL_OK")
</pallas_src>

<mosaic_0001>
module attributes {stable_mosaic.version = 11 : i64} {
  func.func @mlp_kernel(%arg0: i32, %arg1: memref<128x32xf32, #tpu.memory_space<vmem>>, %arg2: memref<64x32xbf16, #tpu.memory_space<vmem>>, %arg3: memref<64x1xf32, #tpu.memory_space<vmem>>, %arg4: memref<16x64xbf16, #tpu.memory_space<vmem>>, %arg5: memref<16x1xf32, #tpu.memory_space<vmem>>, %arg6: memref<8x16xbf16, #tpu.memory_space<vmem>>, %arg7: memref<8x1xf32, #tpu.memory_space<vmem>>, %arg8: memref<8x128xf32, #tpu.memory_space<vmem>>) attributes {dimension_semantics = [#tpu.dimension_semantics<parallel>], iteration_bounds = array<i64: 2>, scalar_prefetch = 0 : i64, scratch_operands = 0 : i64, tpu.core_type = #tpu.core_type<tc>, window_params = [{transform_indices = @transform_0, window_bounds = array<i64: 128, 32>}, {pipeline_mode = #tpu.pipeline_mode<synchronous>, transform_indices = @transform_1, window_bounds = array<i64: 64, 32>}, {pipeline_mode = #tpu.pipeline_mode<synchronous>, transform_indices = @transform_2, window_bounds = array<i64: 64, 1>}, {pipeline_mode = #tpu.pipeline_mode<synchronous>, transform_indices = @transform_3, window_bounds = array<i64: 16, 64>}, {pipeline_mode = #tpu.pipeline_mode<synchronous>, transform_indices = @transform_4, window_bounds = array<i64: 16, 1>}, {pipeline_mode = #tpu.pipeline_mode<synchronous>, transform_indices = @transform_5, window_bounds = array<i64: 8, 16>}, {pipeline_mode = #tpu.pipeline_mode<synchronous>, transform_indices = @transform_6, window_bounds = array<i64: 8, 1>}, {transform_indices = @transform_7, window_bounds = array<i64: 8, 128>}]} {
    %c0 = arith.constant 0 : index
    %c0_0 = arith.constant 0 : index
    %0 = vector.load %arg1[%c0, %c0_0] : memref<128x32xf32, #tpu.memory_space<vmem>>, vector<128x32xf32>
    %1 = arith.truncf %0 : vector<128x32xf32> to vector<128x32xbf16>
    %c0_1 = arith.constant 0 : index
    %c0_2 = arith.constant 0 : index
    %2 = vector.load %arg2[%c0_1, %c0_2] : memref<64x32xbf16, #tpu.memory_space<vmem>>, vector<64x32xbf16>
    %cst = arith.constant dense<0.000000e+00> : vector<64x128xf32>
    %3 = tpu.matmul %2, %1, %cst {dimension_numbers = #tpu.dot_dimension_numbers<[1], [1], [0], [0], [0, 0, 1, 0], [], []>} : vector<64x32xbf16>, vector<128x32xbf16>, vector<64x128xf32> -> vector<64x128xf32>
    %c0_3 = arith.constant 0 : index
    %c0_4 = arith.constant 0 : index
    %4 = vector.load %arg3[%c0_3, %c0_4] : memref<64x1xf32, #tpu.memory_space<vmem>>, vector<64x1xf32>
    %5 = vector.broadcast %4 : vector<64x1xf32> to vector<64x128xf32>
    %6 = arith.addf %3, %5 : vector<64x128xf32>
    %cst_5 = arith.constant 0.000000e+00 : f32
    %7 = vector.broadcast %cst_5 : f32 to vector<64x128xf32>
    %8 = arith.maximumf %6, %7 : vector<64x128xf32>
    %c0_6 = arith.constant 0 : index
    %c0_7 = arith.constant 0 : index
    %9 = vector.load %arg4[%c0_6, %c0_7] : memref<16x64xbf16, #tpu.memory_space<vmem>>, vector<16x64xbf16>
    %10 = arith.truncf %8 : vector<64x128xf32> to vector<64x128xbf16>
    %cst_8 = arith.constant dense<0.000000e+00> : vector<16x128xf32>
    %11 = tpu.matmul %9, %10, %cst_8 {dimension_numbers = #tpu.dot_dimension_numbers<[1], [0], [0], [1], [0, 0, 1, 1], [], []>} : vector<16x64xbf16>, vector<64x128xbf16>, vector<16x128xf32> -> vector<16x128xf32>
    %c0_9 = arith.constant 0 : index
    %c0_10 = arith.constant 0 : index
    %12 = vector.load %arg5[%c0_9, %c0_10] : memref<16x1xf32, #tpu.memory_space<vmem>>, vector<16x1xf32>
    %13 = vector.broadcast %12 : vector<16x1xf32> to vector<16x128xf32>
    %14 = arith.addf %11, %13 : vector<16x128xf32>
    %cst_11 = arith.constant 0.000000e+00 : f32
    %15 = vector.broadcast %cst_11 : f32 to vector<16x128xf32>
    %16 = arith.maximumf %14, %15 : vector<16x128xf32>
    %c0_12 = arith.constant 0 : index
    %c0_13 = arith.constant 0 : index
    %17 = vector.load %arg6[%c0_12, %c0_13] : memref<8x16xbf16, #tpu.memory_space<vmem>>, vector<8x16xbf16>
    %18 = arith.truncf %16 : vector<16x128xf32> to vector<16x128xbf16>
    %cst_14 = arith.constant dense<0.000000e+00> : vector<8x128xf32>
    %19 = tpu.matmul %17, %18, %cst_14 {dimension_numbers = #tpu.dot_dimension_numbers<[1], [0], [0], [1], [0, 0, 1, 1], [], []>} : vector<8x16xbf16>, vector<16x128xbf16>, vector<8x128xf32> -> vector<8x128xf32>
    %c0_15 = arith.constant 0 : index
    %c0_16 = arith.constant 0 : index
    %20 = vector.load %arg7[%c0_15, %c0_16] : memref<8x1xf32, #tpu.memory_space<vmem>>, vector<8x1xf32>
    %21 = vector.broadcast %20 : vector<8x1xf32> to vector<8x128xf32>
    %22 = arith.addf %19, %21 : vector<8x128xf32>
    %c0_17 = arith.constant 0 : index
    %c0_18 = arith.constant 0 : index
    %23 = vector.load %arg8[%c0_17, %c0_18] : memref<8x128xf32, #tpu.memory_space<vmem>>, vector<8x128xf32>
    tpu.vector_store %arg8[%c0_17, %c0_18], %22 {strides = array<i32>} : memref<8x128xf32, #tpu.memory_space<vmem>>, vector<8x128xf32>,
    return
  }
  func.func @transform_0(%arg0: i32) -> (i32, i32) {
    %c0_i32 = arith.constant 0 : i32
    %c0_i32_0 = arith.constant 0 : i32
    return %arg0, %c0_i32 : i32, i32
  }
  func.func @transform_1(%arg0: i32) -> (i32, i32) {
    %c0_i32 = arith.constant 0 : i32
    %c0_i32_0 = arith.constant 0 : i32
    %c0_i32_1 = arith.constant 0 : i32
    return %c0_i32, %c0_i32_0 : i32, i32
  }
  func.func @transform_2(%arg0: i32) -> (i32, i32) {
    %c0_i32 = arith.constant 0 : i32
    %c0_i32_0 = arith.constant 0 : i32
    %c0_i32_1 = arith.constant 0 : i32
    return %c0_i32, %c0_i32_0 : i32, i32
  }
  func.func @transform_3(%arg0: i32) -> (i32, i32) {
    %c0_i32 = arith.constant 0 : i32
    %c0_i32_0 = arith.constant 0 : i32
    %c0_i32_1 = arith.constant 0 : i32
    return %c0_i32, %c0_i32_0 : i32, i32
  }
  func.func @transform_4(%arg0: i32) -> (i32, i32) {
    %c0_i32 = arith.constant 0 : i32
    %c0_i32_0 = arith.constant 0 : i32
    %c0_i32_1 = arith.constant 0 : i32
    return %c0_i32, %c0_i32_0 : i32, i32
  }
  func.func @transform_5(%arg0: i32) -> (i32, i32) {
    %c0_i32 = arith.constant 0 : i32
    %c0_i32_0 = arith.constant 0 : i32
    %c0_i32_1 = arith.constant 0 : i32
    return %c0_i32, %c0_i32_0 : i32, i32
  }
  func.func @transform_6(%arg0: i32) -> (i32, i32) {
    %c0_i32 = arith.constant 0 : i32
    %c0_i32_0 = arith.constant 0 : i32
    %c0_i32_1 = arith.constant 0 : i32
    return %c0_i32, %c0_i32_0 : i32, i32
  }
  func.func @transform_7(%arg0: i32) -> (i32, i32) {
    %c0_i32 = arith.constant 0 : i32
    %c0_i32_0 = arith.constant 0 : i32
    return %c0_i32, %arg0 : i32, i32
  }
}

</mosaic_0001>

<llo_original>
// kernel: tpu_custom_call.1
$region0: #{tpu_custom_call.1}
  #allocation0 [shape = 'u32[]', space=smem, size = 0x4, offset = 0x4, fixed_abs, tag = 'smem constant byte address 0x4 - core index']
  #allocation1 [shape = 'u32[144,128]{1,0:T(1,128)}', space=vmem, size = 0x12000, scoped, tag = 'internal scratch']
  %s0 = inlined_call_operand.vmem [shape: f32[200,32], index: 0, kind: input, shape index: {}]
  %s1 = inlined_call_operand.vmem [shape: bf16[64,32], index: 1, kind: input, shape index: {}]
  %s2 = inlined_call_operand.vmem [shape: f32[64,1], index: 2, kind: input, shape index: {}]
  %s3 = inlined_call_operand.vmem [shape: bf16[16,64], index: 3, kind: input, shape index: {}]
  %s4 = inlined_call_operand.vmem [shape: f32[16,1], index: 4, kind: input, shape index: {}]
  %s5 = inlined_call_operand.vmem [shape: bf16[8,16], index: 5, kind: input, shape index: {}]
  %s6 = inlined_call_operand.vmem [shape: f32[8,1], index: 6, kind: input, shape index: {}]
  %s7 = inlined_call_operand.hbm [shape: f32[8,200], index: 7, kind: output, shape index: {}]
  %s8 = sld [smem:[#allocation0]]
  $region61: #{tpu_custom_call.1} parent=0
    _
  %s10 = ssub.s32 1, %s8
  %s11 = scalar_select 0, %s10, %s8
  $region1: #{tpu_custom_call.1} parent=0
    #allocation2 [shape = 'u8[8192]{0}', space=vmem, size = 0x2000, scoped, tag = 'output window, operand 0']
    #allocation3 [shape = 's32[2]{0}', space=sflag, size = 0x8, scoped, tag = 'scoped memory for tpu_custom_call.1']
    %12 = vsyncpa [#allocation3], 0
    %s13 = scalar_lea.sflag [#allocation3], 1
    %14 = vsyncpa %s13, 0
    loop: start=0, step=1, limit=4
    $region2: #{tpu_custom_call.1} parent=1 // loop_pre_header
      _
    $region3: #{tpu_custom_call.1} parent=1 // loop_header
      %s16 = sphi 0, %s20
      %p17 = scmp.ge.s32.totalorder %s16, 4
      %s26 = sphi 0, %s28
      %s29 = sphi 0, %s26
      %s30 = sphi 0, %s29
      %s46 = sphi 0, %s30
      %s50 = sphi 0, %s50
      %s52 = sphi 0, %s50
      %s53 = sphi 0, %s52
      %s67 = sphi 0, %s53
      %s71 = sphi 0, %s71
      %s73 = sphi 0, %s71
      %s74 = sphi 0, %s73
      %s88 = sphi 0, %s74
      %s92 = sphi 0, %s92
      %s94 = sphi 0, %s92
      %s95 = sphi 0, %s94
      %s109 = sphi 0, %s95
      %s113 = sphi 0, %s113
      %s115 = sphi 0, %s113
      %s116 = sphi 0, %s115
      %s130 = sphi 0, %s116
      %s134 = sphi 0, %s134
      %s136 = sphi 0, %s134
      %s137 = sphi 0, %s136
      %s151 = sphi 0, %s137
      %s155 = sphi 0, %s155
      %s157 = sphi 0, %s155
      %s158 = sphi 0, %s157
      %s172 = sphi 0, %s158
      %s178 = sphi 0, %s180
      %s181 = sphi 0, %s178
      %s182 = sphi 0, %s181
      %s198 = sphi 0, %s182
    $region4: #{tpu_custom_call.1} parent=1 // loop_header_branch
      %19 = sbr.rel (%p17) target = $region8
    $region5: #{tpu_custom_call.1} parent=1 // loop_body
      %s21 = ssub.s32 %s16, 1
      %s22 = ssub.s32 %s16, 2
      %s23 = sadd.s32 %s16, 1
      %s24 = ssub.s32 %s16, %s23
      %p25 = scmp.eq.s32.totalorder %s24, 0
      %s27 = sadd.s32 %s26, 1
      %s28 = scalar_select %p25, %s26, %s27
      %p31 = pneg %p25
      %p32 = scmp.eq.s32.totalorder %s16, 1
      %p33 = por %p31, %p32
      %p34 = scmp.ne.s32.totalorder %s26, %s29
      %p35 = scmp.eq.s32.totalorder %s16, 0
      %p36 = por %p34, %p35
      %p37 = scmp.ne.s32.totalorder %s26, %s29
      %p38 = scmp.eq.s32.totalorder %s21, 1
      %p39 = por %p37, %p38
      %p40 = scmp.ne.s32.totalorder %s29, %s30
      %p41 = scmp.eq.s32.totalorder %s21, 0
      %p42 = por %p40, %p41
      %p43 = scmp.ne.s32.totalorder %s29, %s30
      %p44 = scmp.eq.s32.totalorder %s22, 1
      %p45 = por %p43, %p44
      %p47 = scmp.ne.s32.totalorder %s30, %s46
      %p48 = scmp.eq.s32.totalorder %s22, 0
      %p49 = por %p47, %p48
      %s51 = sadd.s32 %s50, 1
      %p54 = scmp.eq.s32.totalorder %s16, 1
      %p55 = scmp.ne.s32.totalorder %s50, %s52
      %p56 = scmp.eq.s32.totalorder %s16, 0
      %p57 = por %p55, %p56
      %p58 = scmp.ne.s32.totalorder %s50, %s52
      %p59 = scmp.eq.s32.totalorder %s21, 1
      %p60 = por %p58, %p59
      %p61 = scmp.ne.s32.totalorder %s52, %s53
      %p62 = scmp.eq.s32.totalorder %s21, 0
      %p63 = por %p61, %p62
      %p64 = scmp.ne.s32.totalorder %s52, %s53
      %p65 = scmp.eq.s32.totalorder %s22, 1
      %p66 = por %p64, %p65
      %p68 = scmp.ne.s32.totalorder %s53, %s67
      %p69 = scmp.eq.s32.totalorder %s22, 0
      %p70 = por %p68, %p69
      %s72 = sadd.s32 %s71, 1
      %p75 = scmp.eq.s32.totalorder %s16, 1
      %p76 = scmp.ne.s32.totalorder %s71, %s73
      %p77 = scmp.eq.s32.totalorder %s16, 0
      %p78 = por %p76, %p77
      %p79 = scmp.ne.s32.totalorder %s71, %s73
      %p80 = scmp.eq.s32.totalorder %s21, 1
      %p81 = por %p79, %p80
      %p82 = scmp.ne.s32.totalorder %s73, %s74
      %p83 = scmp.eq.s32.totalorder %s21, 0
      %p84 = por %p82, %p83
      %p85 = scmp.ne.s32.totalorder %s73, %s74
      %p86 = scmp.eq.s32.totalorder %s22, 1
      %p87 = por %p85, %p86
      %p89 = scmp.ne.s32.totalorder %s74, %s88
      %p90 = scmp.eq.s32.totalorder %s22, 0
      %p91 = por %p89, %p90
      %s93 = sadd.s32 %s92, 1
      %p96 = scmp.eq.s32.totalorder %s16, 1
      %p97 = scmp.ne.s32.totalorder %s92, %s94
      %p98 = scmp.eq.s32.totalorder %s16, 0
      %p99 = por %p97, %p98
      %p100 = scmp.ne.s32.totalorder %s92, %s94
      %p101 = scmp.eq.s32.totalorder %s21, 1
      %p102 = por %p100, %p101
      %p103 = scmp.ne.s32.totalorder %s94, %s95
      %p104 = scmp.eq.s32.totalorder %s21, 0
      %p105 = por %p103, %p104
      %p106 = scmp.ne.s32.totalorder %s94, %s95
      %p107 = scmp.eq.s32.totalorder %s22, 1
      %p108 = por %p106, %p107
      %p110 = scmp.ne.s32.totalorder %s95, %s109
      %p111 = scmp.eq.s32.totalorder %s22, 0
      %p112 = por %p110, %p111
      %s114 = sadd.s32 %s113, 1
      %p117 = scmp.eq.s32.totalorder %s16, 1
      %p118 = scmp.ne.s32.totalorder %s113, %s115
      %p119 = scmp.eq.s32.totalorder %s16, 0
      %p120 = por %p118, %p119
      %p121 = scmp.ne.s32.totalorder %s113, %s115
      %p122 = scmp.eq.s32.totalorder %s21, 1
      %p123 = por %p121, %p122
      %p124 = scmp.ne.s32.totalorder %s115, %s116
      %p125 = scmp.eq.s32.totalorder %s21, 0
      %p126 = por %p124, %p125
      %p127 = scmp.ne.s32.totalorder %s115, %s116
      %p128 = scmp.eq.s32.totalorder %s22, 1
      %p129 = por %p127, %p128
      %p131 = scmp.ne.s32.totalorder %s116, %s130
      %p132 = scmp.eq.s32.totalorder %s22, 0
      %p133 = por %p131, %p132
      %s135 = sadd.s32 %s134, 1
      %p138 = scmp.eq.s32.totalorder %s16, 1
      %p139 = scmp.ne.s32.totalorder %s134, %s136
      %p140 = scmp.eq.s32.totalorder %s16, 0
      %p141 = por %p139, %p140
      %p142 = scmp.ne.s32.totalorder %s134, %s136
      %p143 = scmp.eq.s32.totalorder %s21, 1
      %p144 = por %p142, %p143
      %p145 = scmp.ne.s32.totalorder %s136, %s137
      %p146 = scmp.eq.s32.totalorder %s21, 0
      %p147 = por %p145, %p146
      %p148 = scmp.ne.s32.totalorder %s136, %s137
      %p149 = scmp.eq.s32.totalorder %s22, 1
      %p150 = por %p148, %p149
      %p152 = scmp.ne.s32.totalorder %s137, %s151
      %p153 = scmp.eq.s32.totalorder %s22, 0
      %p154 = por %p152, %p153
      %s156 = sadd.s32 %s155, 1
      %p159 = scmp.eq.s32.totalorder %s16, 1
      %p160 = scmp.ne.s32.totalorder %s155, %s157
      %p161 = scmp.eq.s32.totalorder %s16, 0
      %p162 = por %p160, %p161
      %p163 = scmp.ne.s32.totalorder %s155, %s157
      %p164 = scmp.eq.s32.totalorder %s21, 1
      %p165 = por %p163, %p164
      %p166 = scmp.ne.s32.totalorder %s157, %s158
      %p167 = scmp.eq.s32.totalorder %s21, 0
      %p168 = por %p166, %p167
      %p169 = scmp.ne.s32.totalorder %s157, %s158
      %p170 = scmp.eq.s32.totalorder %s22, 1
      %p171 = por %p169, %p170
      %p173 = scmp.ne.s32.totalorder %s158, %s172
      %p174 = scmp.eq.s32.totalorder %s22, 0
      %p175 = por %p173, %p174
      %s176 = ssub.s32 %s16, %s23
      %p177 = scmp.eq.s32.totalorder %s176, 0
      %s179 = sadd.s32 %s178, 1
      %s180 = scalar_select %p177, %s178, %s179
      %p183 = pneg %p177
      %p184 = scmp.eq.s32.totalorder %s16, 1
      %p185 = por %p183, %p184
      %p186 = scmp.ne.s32.totalorder %s178, %s181
      %p187 = scmp.eq.s32.totalorder %s16, 0
      %p188 = por %p186, %p187
      %p189 = scmp.ne.s32.totalorder %s178, %s181
      %p190 = scmp.eq.s32.totalorder %s21, 1
      %p191 = por %p189, %p190
      %p192 = scmp.ne.s32.totalorder %s181, %s182
      %p193 = scmp.eq.s32.totalorder %s21, 0
      %p194 = por %p192, %p193
      %p195 = scmp.ne.s32.totalorder %s181, %s182
      %p196 = scmp.eq.s32.totalorder %s22, 1
      %p197 = por %p195, %p196
      %p199 = scmp.ne.s32.totalorder %s182, %s198
      %p200 = scmp.eq.s32.totalorder %s22, 0
      %p201 = por %p199, %p200
      %p202 = scmp.le.s32.totalorder 1, %s16
      %p203 = scmp.lt.s32.totalorder %s16, 3
      %p204 = pnand %p202, %p203
      %p205 = pneg %p204
      // Predicated region
      $region9: #{tpu_custom_call.1} parent=5 // pred_check
        _
      $region10: #{tpu_custom_call.1} parent=5 // pred_check_branch
        %207 = sbr.rel (%p204) target = $region12
      $region11: #{tpu_custom_call.1} parent=5 // pred_region
        %s208 = ssub.s32 %s16, 1
        // Predicated region
        $region13: #{tpu_custom_call.1} parent=11 // pred_check
          %p209 = pneg %p63
        $region14: #{tpu_custom_call.1} parent=11 // pred_check_branch
          %211 = sbr.rel (%p209) target = $region16
        $region15: #{tpu_custom_call.1} parent=11 // pred_region
          _
        $region16: #{tpu_custom_call.1} parent=11 // pred_fallthru
          _
        // Predicated region
        $region17: #{tpu_custom_call.1} parent=11 // pred_check
          %p212 = pneg %p84
        $region18: #{tpu_custom_call.1} parent=11 // pred_check_branch
          %214 = sbr.rel (%p212) target = $region20
        $region19: #{tpu_custom_call.1} parent=11 // pred_region
          _
        $region20: #{tpu_custom_call.1} parent=11 // pred_fallthru
          _
        // Predicated region
        $region21: #{tpu_custom_call.1} parent=11 // pred_check
          %p215 = pneg %p105
        $region22: #{tpu_custom_call.1} parent=11 // pred_check_branch
          %217 = sbr.rel (%p215) target = $region24
        $region23: #{tpu_custom_call.1} parent=11 // pred_region
          _
        $region24: #{tpu_custom_call.1} parent=11 // pred_fallthru
          _
        // Predicated region
        $region25: #{tpu_custom_call.1} parent=11 // pred_check
          %p218 = pneg %p126
        $region26: #{tpu_custom_call.1} parent=11 // pred_check_branch
          %220 = sbr.rel (%p218) target = $region28
        $region27: #{tpu_custom_call.1} parent=11 // pred_region
          _
        $region28: #{tpu_custom_call.1} parent=11 // pred_fallthru
          _
        // Predicated region
        $region29: #{tpu_custom_call.1} parent=11 // pred_check
          %p221 = pneg %p147
        $region30: #{tpu_custom_call.1} parent=11 // pred_check_branch
          %223 = sbr.rel (%p221) target = $region32
        $region31: #{tpu_custom_call.1} parent=11 // pred_region
          _
        $region32: #{tpu_custom_call.1} parent=11 // pred_fallthru
          _
        // Predicated region
        $region33: #{tpu_custom_call.1} parent=11 // pred_check
          %p224 = pneg %p168
        $region34: #{tpu_custom_call.1} parent=11 // pred_check_branch
          %226 = sbr.rel (%p224) target = $region36
        $region35: #{tpu_custom_call.1} parent=11 // pred_region
          _
        $region36: #{tpu_custom_call.1} parent=11 // pred_fallthru
          _
      $region12: #{tpu_custom_call.1} parent=5 // pred_fallthru
        _
      %p227 = scmp.lt.s32.totalorder %s16, 2
      // Predicated region
      $region37: #{tpu_custom_call.1} parent=5 // pred_check
        %p228 = pneg %p227
      $region38: #{tpu_custom_call.1} parent=5 // pred_check_branch
        %230 = sbr.rel (%p228) target = $region40
      $region39: #{tpu_custom_call.1} parent=5 // pred_region
        // Predicated region
        $region41: #{tpu_custom_call.1} parent=39 // pred_check
          %p231 = pneg %p36
        $region42: #{tpu_custom_call.1} parent=39 // pred_check_branch
          %233 = sbr.rel (%p231) target = $region44
        $region43: #{tpu_custom_call.1} parent=39 // pred_region
          %s234 = smul.u32 16, %s16
          %s235 = ssub.s32 25, %s234
          %p236 = scmp.lt.s32.totalorder %s235, 16
          %s237 = scalar_select %p236, %s235, 16
          %s238 = smul.u32 128, %s237
          %p239 = scmp.lt.s32.totalorder %s234, 24
          %s240 = scalar_select %p239, %s234, 24
          %s241 = smul.addr %s240, 8
          %s242 = scalar_lea.vmem %s0, %s241
          %s243 = smul.u32 16, %s16
          %s244 = ssub.s32 25, %s243
          %p245 = scmp.lt.s32.totalorder %s244, 16
          %s246 = scalar_select %p245, %s244, 16
          %s247 = smul.u32 128, %s246
        $region44: #{tpu_custom_call.1} parent=39 // pred_fallthru
          _
      $region40: #{tpu_custom_call.1} parent=5 // pred_fallthru
        _
      %p248 = scmp.le.s32.totalorder 1, %s16
      %p249 = scmp.lt.s32.totalorder %s16, 3
      %p250 = pnand %p248, %p249
      %p251 = pneg %p250
      // Predicated region
      $region45: #{tpu_custom_call.1} parent=5 // pred_check
        _
      $region46: #{tpu_custom_call.1} parent=5 // pred_check_branch
        %253 = sbr.rel (%p250) target = $region48
      $region47: #{tpu_custom_call.1} parent=5 // pred_region
        %s254 = ssub.s32 %s16, 1
        %s255 = smul.u32 16, %s21
        %s256 = ssub.s32 25, %s255
        %p257 = scmp.lt.s32.totalorder %s256, 16
        %s258 = scalar_select %p257, %s256, 16
        %s259 = smul.u32 128, %s258
        %p260 = scmp.lt.s32.totalorder %s255, 24
        %s261 = scalar_select %p260, %s255, 24
        %s262 = smul.addr %s261, 8
        %s263 = scalar_lea.vmem %s0, %s262
        %p264 = pneg %p42
        %p265 = pneg %p39
        %p266 = pneg %p63
        %p267 = pneg %p60
        %p268 = pneg %p84
        %p269 = pneg %p81
        %p270 = pneg %p105
        %p271 = pneg %p102
        %p272 = pneg %p126
        %p273 = pneg %p123
        %p274 = pneg %p147
        %p275 = pneg %p144
        %p276 = pneg %p168
        %p277 = pneg %p165
        %p278 = pneg %p194
        %p279 = pneg %p191
        %s280 = sand.u32 %s181, 1
        %s281 = scalar_lea.sflag [#allocation3], %s280
        %s282 = sand.u32 %s181, 1
        %s283 = smul.addr %s282, 8
        %s284 = scalar_lea.vmem [#allocation2], %s283
        %s285 = smul.u32 16, %s21
        %s286 = ssub.s32 25, %s285
        %p287 = scmp.lt.s32.totalorder %s286, 16
        %s288 = scalar_select %p287, %s286, 16
        %s289 = smul.u32 128, %s288
        %p290 = scmp.lt.s32.totalorder %s285, 24
        %s291 = scalar_select %p290, %s285, 24
        %s292 = smul.addr %s291, 8
        %s293 = scalar_lea.vmem %s0, %s292
        %s294 = smul.u32 16, %s21
        %s295 = ssub.s32 25, %s294
        %p296 = scmp.lt.s32.totalorder %s295, 16
        %s297 = scalar_select %p296, %s295, 16
        %s298 = smul.u32 128, %s297
        %v300 = vld [vmem:[%s293] sm:$0xff]
        %v301 = vld [vmem:[%s293 + $0x8] sm:$0xff]
        %v302 = vld [vmem:[%s293 + $0x10] sm:$0xff]
        %v303 = vld [vmem:[%s293 + $0x18] sm:$0xff]
        %v304 = vld [vmem:[%s293 + $0x20] sm:$0xff]
        %v305 = vld [vmem:[%s293 + $0x28] sm:$0xff]
        %v306 = vld [vmem:[%s293 + $0x30] sm:$0xff]
        %v307 = vld [vmem:[%s293 + $0x38] sm:$0xff]
        %v308 = vld [vmem:[%s293 + $0x40] sm:$0xff]
        %v309 = vld [vmem:[%s293 + $0x48] sm:$0xff]
        %v310 = vld [vmem:[%s293 + $0x50] sm:$0xff]
        %v311 = vld [vmem:[%s293 + $0x58] sm:$0xff]
        %v312 = vld [vmem:[%s293 + $0x60] sm:$0xff]
        %v313 = vld [vmem:[%s293 + $0x68] sm:$0xff]
        %v314 = vld [vmem:[%s293 + $0x70] sm:$0xff]
        %v315 = vld [vmem:[%s293 + $0x78] sm:$0xff]
        %v316 = vpack.c.bf16 %v301, %v300
        %v317 = vpack.c.bf16 %v303, %v302
        %v318 = vpack.c.bf16 %v305, %v304
        %v319 = vpack.c.bf16 %v307, %v306
        %v320 = vpack.c.bf16 %v309, %v308
        %v321 = vpack.c.bf16 %v311, %v310
        %v322 = vpack.c.bf16 %v313, %v312
        %v323 = vpack.c.bf16 %v315, %v314
        %v324 = vld [vmem:[%s1] sm:$0xf]
        %v325 = vld [vmem:[%s1 + $0x4] sm:$0xf]
        %v326 = vld [vmem:[%s1 + $0x8] sm:$0xf]
        %v327 = vld [vmem:[%s1 + $0xc] sm:$0xf]
        %v328 = vld [vmem:[%s1 + $0x10] sm:$0xf]
        %v329 = vld [vmem:[%s1 + $0x14] sm:$0xf]
        %v330 = vld [vmem:[%s1 + $0x18] sm:$0xf]
        %v331 = vld [vmem:[%s1 + $0x1c] sm:$0xf]
        %v332 = vld [vmem:[%s2] sm:$0xff]
        %v333 = vld [vmem:[%s2 + $0x8] sm:$0xff]
        %v334 = vld [vmem:[%s2 + $0x10] sm:$0xff]
        %v335 = vld [vmem:[%s2 + $0x18] sm:$0xff]
        %v336 = vld [vmem:[%s2 + $0x20] sm:$0xff]
        %v337 = vld [vmem:[%s2 + $0x28] sm:$0xff]
        %v338 = vld [vmem:[%s2 + $0x30] sm:$0xff]
        %v339 = vld [vmem:[%s2 + $0x38] sm:$0xff]
        %341 = vset.pattern.permute.xlu0 0
        %342 = vperm.xlu0 %341, %v332
        %v343 = vpop.permute.xlu0 %342
        %346 = vset.pattern.permute.xlu0 0
        %347 = vperm.xlu0 %346, %v333
        %v348 = vpop.permute.xlu0 %347
        %351 = vset.pattern.permute.xlu0 0
        %352 = vperm.xlu0 %351, %v334
        %v353 = vpop.permute.xlu0 %352
        %356 = vset.pattern.permute.xlu0 0
        %357 = vperm.xlu0 %356, %v335
        %v358 = vpop.permute.xlu0 %357
        %361 = vset.pattern.permute.xlu0 0
        %362 = vperm.xlu0 %361, %v336
        %v363 = vpop.permute.xlu0 %362
        %366 = vset.pattern.permute.xlu0 0
        %367 = vperm.xlu0 %366, %v337
        %v368 = vpop.permute.xlu0 %367
        %371 = vset.pattern.permute.xlu0 0
        %372 = vperm.xlu0 %371, %v338
        %v373 = vpop.permute.xlu0 %372
        %376 = vset.pattern.permute.xlu0 0
        %377 = vperm.xlu0 %376, %v339
        %v378 = vpop.permute.xlu0 %377
        %v388 = vunpack.c.l.b16 %v324
        %v389 = vunpack.c.l.b16 %v325
        %v390 = vunpack.c.l.b16 %v326
        %v391 = vunpack.c.l.b16 %v327
        %v392 = vunpack.c.l.b16 %v328
        %v393 = vunpack.c.l.b16 %v329
        %v394 = vunpack.c.l.b16 %v330
        %v395 = vunpack.c.l.b16 %v331
        %v396 = vpack.c.b16 %v389, %v388
        %v397 = vpack.c.b16 %v391, %v390
        %v398 = vpack.c.b16 %v393, %v392
        %v399 = vpack.c.b16 %v395, %v394
        %vm400 = vcmask 261120
        %v402 = vsel %vm400, %v396, 0
        %v405 = vsel %vm400, %v397, 0
        %v408 = vsel %vm400, %v398, 0
        %v411 = vsel %vm400, %v399, 0
        %v414 = vsel %vm400, %v316, 0
        %v417 = vsel %vm400, %v317, 0
        %v420 = vsel %vm400, %v318, 0
        %v423 = vsel %vm400, %v319, 0
        %v426 = vsel %vm400, %v320, 0
        %v429 = vsel %vm400, %v321, 0
        %v432 = vsel %vm400, %v322, 0
        %v435 = vsel %vm400, %v323, 0
        %437 = vmatprep.subr.bf16.mxu0 0
        %438 = vmatpush1.bf16.xpose.msra.mxu0 %v414
        %439 = vmatprep.subr.bf16.mxu0 0
        %440 = vmatpush1.bf16.xpose.msra.mxu0 %v417
        %441 = vmatprep.subr.bf16.mxu0 0
        %442 = vmatpush1.bf16.xpose.msra.mxu0 %v420
        %443 = vmatprep.subr.bf16.mxu0 0
        %444 = vmatpush1.bf16.xpose.msra.mxu0 %v423
        %445 = vmatprep.subr.bf16.mxu0 0
        %446 = vmatpush1.bf16.xpose.msra.mxu0 %v426
        %447 = vmatprep.subr.bf16.mxu0 0
        %448 = vmatpush1.bf16.xpose.msra.mxu0 %v429
        %449 = vmatprep.subr.bf16.mxu0 0
        %450 = vmatpush1.bf16.xpose.msra.mxu0 %v432
        %451 = vmatprep.subr.bf16.mxu0 0
        %452 = vmatpush1.bf16.xpose.msra.mxu0 %v435
        %453 = vmatprep.subr.bf16.mxu0 0
        %454 = vmatpush1.bf16.xpose.msra.mxu0 0
        %455 = vmatprep.subr.bf16.mxu0 0
        %456 = vmatpush1.bf16.xpose.msra.mxu0 0
        %457 = vmatprep.subr.bf16.mxu0 0
        %458 = vmatpush1.bf16.xpose.msra.mxu0 0
        %459 = vmatprep.subr.bf16.mxu0 0
        %460 = vmatpush1.bf16.xpose.msra.mxu0 0
        %461 = vmatprep.subr.bf16.mxu0 0
        %462 = vmatpush1.bf16.xpose.msra.mxu0 0
        %463 = vmatprep.subr.bf16.mxu0 0
        %464 = vmatpush1.bf16.xpose.msra.mxu0 0
        %465 = vmatprep.subr.bf16.mxu0 0
        %466 = vmatpush1.bf16.xpose.msra.mxu0 0
        %467 = vmatprep.subr.bf16.mxu0 0
        %468 = vmatpush1.bf16.xpose.msra.mxu0 0
        %469 = vmatprep.mubr.bf16.mxu0 0
        %470 = vmatmul.mubr.bf16.gmra.mrb[0].mxu0 %v402
        %v471 = vpop.f32.mrb[0].mxu0
        %v472 = vadd.f32 %v343, %v471
        %v473 = vpop.f32.mrb[0].mxu0
        %v474 = vpop.f32.mrb[0].mxu0
        %v475 = vadd.f32 %v348, %v474
        %v476 = vpop.f32.mrb[0].mxu0
        %477 = vmatprep.mubr.bf16.mxu0 0
        %478 = vmatmul.mubr.bf16.gmra.mrb[0].mxu0 %v405
        %v479 = vpop.f32.mrb[0].mxu0
        %v480 = vadd.f32 %v353, %v479
        %v481 = vpop.f32.mrb[0].mxu0
        %v482 = vpop.f32.mrb[0].mxu0
        %v483 = vadd.f32 %v358, %v482
        %v484 = vpop.f32.mrb[0].mxu0
        %485 = vmatprep.mubr.bf16.mxu0 0
        %486 = vmatmul.mubr.bf16.gmra.mrb[0].mxu0 %v408
        %v487 = vpop.f32.mrb[0].mxu0
        %v488 = vadd.f32 %v363, %v487
        %v489 = vpop.f32.mrb[0].mxu0
        %v490 = vpop.f32.mrb[0].mxu0
        %v491 = vadd.f32 %v368, %v490
        %v492 = vpop.f32.mrb[0].mxu0
        %493 = vmatprep.mubr.bf16.mxu0 0
        %494 = vmatmul.mubr.bf16.gmra.mrb[0].mxu0 %v411
        %v495 = vpop.f32.mrb[0].mxu0
        %v496 = vadd.f32 %v373, %v495
        %v497 = vpop.f32.mrb[0].mxu0
        %v498 = vpop.f32.mrb[0].mxu0
        %v499 = vadd.f32 %v378, %v498
        %v500 = vpop.f32.mrb[0].mxu0
        %501 = vdwg.mxu0
        %v502 = vmax.f32 %v472, 0.0
        %v503 = vmax.f32 %v475, 0.0
        %v504 = vmax.f32 %v480, 0.0
        %v505 = vmax.f32 %v483, 0.0
        %v506 = vmax.f32 %v488, 0.0
        %v507 = vmax.f32 %v491, 0.0
        %v508 = vmax.f32 %v496, 0.0
        %v509 = vmax.f32 %v499, 0.0
        %v510 = vld [vmem:[%s3] sm:$0xf]
        %v511 = vld [vmem:[%s3 + $0x4] sm:$0xf]
        %v512 = vpack.c.bf16 %v503, %v502
        %v513 = vpack.c.bf16 %v505, %v504
        %v514 = vpack.c.bf16 %v507, %v506
        %v515 = vpack.c.bf16 %v509, %v508
        %v516 = vld [vmem:[%s4] sm:$0xff]
        %v517 = vld [vmem:[%s4 + $0x8] sm:$0xff]
        %519 = vset.pattern.permute.xlu0 0
        %520 = vperm.xlu0 %519, %v516
        %v521 = vpop.permute.xlu0 %520
        %524 = vset.pattern.permute.xlu0 0
        %525 = vperm.xlu0 %524, %v517
        %v526 = vpop.permute.xlu0 %525
        %v530 = vunpack.c.l.b16 %v510
        %v531 = vunpack.c.l.b16 %v511
        %v532 = vpack.c.b16 %v531, %v530
        %vm533 = vcmask 523264
        %v535 = vsel %vm533, %v532, 0
        %537 = vmatprep.subr.bf16.mxu0 0
        %538 = vmatpush1.bf16.msra.mxu0 %v512
        %539 = vmatprep.subr.bf16.mxu0 0
        %540 = vmatpush1.bf16.msra.mxu0 %v513
        %541 = vmatprep.subr.bf16.mxu0 0
        %542 = vmatpush1.bf16.msra.mxu0 %v514
        %543 = vmatprep.subr.bf16.mxu0 0
        %544 = vmatpush1.bf16.msra.mxu0 %v515
        %545 = vmatprep.subr.bf16.mxu0 0
        %546 = vmatpush1.bf16.msra.mxu0 0
        %547 = vmatprep.subr.bf16.mxu0 0
        %548 = vmatpush1.bf16.msra.mxu0 0
        %549 = vmatprep.subr.bf16.mxu0 0
        %550 = vmatpush1.bf16.msra.mxu0 0
        %551 = vmatprep.subr.bf16.mxu0 0
        %552 = vmatpush1.bf16.msra.mxu0 0
        %553 = vmatprep.subr.bf16.mxu0 0
        %554 = vmatpush1.bf16.msra.mxu0 0
        %555 = vmatprep.subr.bf16.mxu0 0
        %556 = vmatpush1.bf16.msra.mxu0 0
        %557 = vmatprep.subr.bf16.mxu0 0
        %558 = vmatpush1.bf16.msra.mxu0 0
        %559 = vmatprep.subr.bf16.mxu0 0
        %560 = vmatpush1.bf16.msra.mxu0 0
        %561 = vmatprep.subr.bf16.mxu0 0
        %562 = vmatpush1.bf16.msra.mxu0 0
        %563 = vmatprep.subr.bf16.mxu0 0
        %564 = vmatpush1.bf16.msra.mxu0 0
        %565 = vmatprep.subr.bf16.mxu0 0
        %566 = vmatpush1.bf16.msra.mxu0 0
        %567 = vmatprep.subr.bf16.mxu0 0
        %568 = vmatpush1.bf16.msra.mxu0 0
        %569 = vmatprep.mubr.bf16.mxu0 0
        %570 = vmatmul.mubr.bf16.gmra.mrb[0].mxu0 %v535
        %v571 = vpop.f32.mrb[0].mxu0
        %v572 = vadd.f32 %v521, %v571
        %v573 = vpop.f32.mrb[0].mxu0
        %v574 = vpop.f32.mrb[0].mxu0
        %v575 = vadd.f32 %v526, %v574
        %v576 = vpop.f32.mrb[0].mxu0
        %577 = vdwg.mxu0
        %v578 = vmax.f32 %v572, 0.0
        %v579 = vmax.f32 %v575, 0.0
        %v580 = vld [vmem:[%s5] sm:$0xf]
        %v581 = vpack.c.bf16 %v579, %v578
        %v582 = vld [vmem:[%s6] sm:$0xff]
        %584 = vset.pattern.permute.xlu0 0
        %585 = vperm.xlu0 %584, %v582
        %v586 = vpop.permute.xlu0 %585
        %vm588 = vcmask 130048
        %v590 = vsel %vm588, %v580, 0
        %592 = vmatprep.subr.bf16.mxu0 0
        %593 = vmatpush1.bf16.msra.mxu0 %v581
        %594 = vmatprep.subr.bf16.mxu0 0
        %595 = vmatpush1.bf16.msra.mxu0 0
        %596 = vmatprep.subr.bf16.mxu0 0
        %597 = vmatpush1.bf16.msra.mxu0 0
        %598 = vmatprep.subr.bf16.mxu0 0
        %599 = vmatpush1.bf16.msra.mxu0 0
        %600 = vmatprep.subr.bf16.mxu0 0
        %601 = vmatpush1.bf16.msra.mxu0 0
        %602 = vmatprep.subr.bf16.mxu0 0
        %603 = vmatpush1.bf16.msra.mxu0 0
        %604 = vmatprep.subr.bf16.mxu0 0
        %605 = vmatpush1.bf16.msra.mxu0 0
        %606 = vmatprep.subr.bf16.mxu0 0
        %607 = vmatpush1.bf16.msra.mxu0 0
        %608 = vmatprep.subr.bf16.mxu0 0
        %609 = vmatpush1.bf16.msra.mxu0 0
        %610 = vmatprep.subr.bf16.mxu0 0
        %611 = vmatpush1.bf16.msra.mxu0 0
        %612 = vmatprep.subr.bf16.mxu0 0
        %613 = vmatpush1.bf16.msra.mxu0 0
        %614 = vmatprep.subr.bf16.mxu0 0
        %615 = vmatpush1.bf16.msra.mxu0 0
        %616 = vmatprep.subr.bf16.mxu0 0
        %617 = vmatpush1.bf16.msra.mxu0 0
        %618 = vmatprep.subr.bf16.mxu0 0
        %619 = vmatpush1.bf16.msra.mxu0 0
        %620 = vmatprep.subr.bf16.mxu0 0
        %621 = vmatpush1.bf16.msra.mxu0 0
        %622 = vmatprep.subr.bf16.mxu0 0
        %623 = vmatpush1.bf16.msra.mxu0 0
        %624 = vmatprep.mubr.bf16.mxu0 0
        %625 = vmatmul.mubr.bf16.gmra.mrb[0].mxu0 %v590
        %v626 = vpop.f32.mrb[0].mxu0
        %v627 = vadd.f32 %v586, %v626
        %v628 = vpop.f32.mrb[0].mxu0
        %v629 = vpop.f32.mrb[0].mxu0
        %v630 = vpop.f32.mrb[0].mxu0
        %631 = vdwg.mxu0
        %632 = vst [vmem:[%s284] sm:$0xff] %v627
        %s633 = sand.u32 %s181, 1
        %s634 = scalar_lea.sflag [#allocation3], %s633
        %s635 = sand.u32 %s181, 1
        %s636 = smul.addr %s635, 8
        %s637 = scalar_lea.vmem [#allocation2], %s636
        // Predicated region
        $region49: #{tpu_custom_call.1} parent=47 // pred_check
          %p638 = pneg %p191
        $region50: #{tpu_custom_call.1} parent=47 // pred_check_branch
          %640 = sbr.rel (%p638) target = $region52
        $region51: #{tpu_custom_call.1} parent=47 // pred_region
          %s642 = ssub.s32 128, 128
          %643 = vsyncadd %s634, %s642
          %s644 = smul.addr %s21, 128
          %s645 = scalar_lea.hbm %s7, %s644
          %s647 = sshll.u32 %s637, 4
          %s648 = int_to_ptr.vmem [resolvable:$true] %s647
          %650 = dma.vmem_to_hbm [thread:$0]  %s648, 128, %s645, %s634
        $region52: #{tpu_custom_call.1} parent=47 // pred_fallthru
          _
      $region48: #{tpu_custom_call.1} parent=5 // pred_fallthru
        _
      %p651 = scmp.le.s32.totalorder 2, %s16
      // Predicated region
      $region53: #{tpu_custom_call.1} parent=5 // pred_check
        %p652 = pneg %p651
      $region54: #{tpu_custom_call.1} parent=5 // pred_check_branch
        %654 = sbr.rel (%p652) target = $region56
      $region55: #{tpu_custom_call.1} parent=5 // pred_region
        %s655 = ssub.s32 %s16, 2
        // Predicated region
        $region57: #{tpu_custom_call.1} parent=55 // pred_check
          %p656 = pneg %p197
        $region58: #{tpu_custom_call.1} parent=55 // pred_check_branch
          %658 = sbr.rel (%p656) target = $region60
        $region59: #{tpu_custom_call.1} parent=55 // pred_region
          %s659 = sand.u32 %s182, 1
          %s660 = scalar_lea.sflag [#allocation3], %s659
          %s661 = sand.u32 %s182, 1
          %s662 = smul.addr %s661, 8
          %s663 = scalar_lea.vmem [#allocation2], %s662
          %664 = dma.done %s660, 128
        $region60: #{tpu_custom_call.1} parent=55 // pred_fallthru
          _
      $region56: #{tpu_custom_call.1} parent=5 // pred_fallthru
        _
    $region6: #{tpu_custom_call.1} parent=1 // loop_footer
      %s20 = sadd.s32 1, %s16
    $region7: #{tpu_custom_call.1} parent=1 // loop_footer_branch
      %15 = sbr.rel target = $region3
    $region8: #{tpu_custom_call.1} parent=1 // loop_exit
      _
    %665 = vsyncpa [#allocation3], 1
    %s666 = scalar_lea.sflag [#allocation3], 1
    %667 = vsyncpa %s666, 1

</llo_original>
